<compile_context>
chip_gen: v7x
topology: tpu7x:2x2x1
jax: 0.10.0
libtpu: 0.0.40
codegen_flags: <defaults>
</compile_context>

<pallas_src>
import functools

import jax
import jax.numpy as jnp
from jax.experimental import pallas as pl
from jax.experimental.pallas import tpu as pltpu


def _round_up(n: int, m: int) -> int:
    return ((n + m - 1) // m) * m


def _cdiv(n: int, m: int) -> int:
    return (n + m - 1) // m


def _sppca_forward_kernel(ut_ref, x_ref, o_ref, *, tf, n_feature,
                          ut_resident, compute_dtype):
    """One (sample-tile j, K-tile k) grid step of out = Ut @ x.

    ut_ref : (L, F_pad) resident basis (or (L, tf) tile if not resident), f32
    x_ref  : (tf, tn)   data tile, native dtype
    o_ref  : (L, tn)    f32 output block, resident across k (accumulator)
    """
    k = pl.program_id(1)

    @pl.when(k == 0)
    def _init():
        o_ref[...] = jnp.zeros_like(o_ref)

    if ut_resident:
        # Slice the K-chunk out of the VMEM-resident Ut (128-aligned start).
        ut = ut_ref[:, pl.ds(pl.multiple_of(k * tf, 128), tf)]
    else:
        ut = ut_ref[...]

    x = x_ref[...]

    if n_feature % tf != 0:
        # Ragged K tail: rows of this block past n_feature come from an
        # out-of-bounds read whose contents are unspecified (could be
        # NaN/Inf); zero them so they cannot pollute the contraction.
        row = jax.lax.broadcasted_iota(jnp.int32, x.shape, 0)
        x = jnp.where(row < (n_feature - k * tf), x, 0)

    if compute_dtype is not None:
        ut = ut.astype(compute_dtype)
        x = x.astype(compute_dtype)

    o_ref[...] += jnp.dot(ut, x, preferred_element_type=jnp.float32)


@functools.partial(
    jax.jit,
    static_argnames=("tn", "tf", "compute_dtype", "ut_resident_bytes"))
def sppca_forward(u, x, *, tn=2048, tf=1024, compute_dtype=None,
                  ut_resident_bytes=8 * 1024 * 1024):
    """SpatialPCA.forward: project x onto the PC basis, i.e. U.T @ x.

    Args:
      u: (n_feature, n_latent) float32 PC basis.
      x: (n_feature, n_sample) data (features x samples), streamed as-is.
      tn: sample-axis (lane) tile, multiple of 128.
      tf: feature/contraction tile, multiple of 128.
      compute_dtype: optional in-kernel cast for the dot operands (e.g.
        jnp.bfloat16).  None keeps the native dtypes (tightest accuracy).
      ut_resident_bytes: max bytes for keeping Ut fully VMEM-resident.
    Returns:
      (n_latent, n_sample) float32 latent representation.
    """
    F, L = u.shape
    F2, S = x.shape
    assert F == F2, "feature dims must match"
    assert tn % 128 == 0 and tf % 128 == 0, "tiles must be multiples of 128"

    # Clamp tiles to the (128-rounded) problem size; never pad / cast x.
    tn = min(tn, _round_up(S, 128))
    tf = min(tf, _round_up(F, 128))
    # Give the 'parallel' sample axis >= 2 grid steps when S allows it, so
    # both v7x TensorCores get work (no-op for large S / single-TC chips).
    if S >= 2 * 128:
        tn = min(tn, _round_up(_cdiv(S, 2), 128))

    grid = (_cdiv(S, tn), _cdiv(F, tf))  # (sample tiles, K tiles); K last.

    # Ut is tiny: transpose + zero-pad once (negligible HBM), keep f32.
    F_pad = _round_up(F, tf)
    ut = u.T
    if F_pad != F:
        ut = jnp.pad(ut, ((0, 0), (0, F_pad - F)))

    ut_resident = (L * F_pad * ut.dtype.itemsize) <= ut_resident_bytes
    if ut_resident:
        # Single block, constant index_map -> loaded into VMEM once.
        ut_spec = pl.BlockSpec((L, F_pad), lambda j, k: (0, 0))
    else:
        ut_spec = pl.BlockSpec((L, tf), lambda j, k: (0, k))

    kernel = functools.partial(
        _sppca_forward_kernel,
        tf=tf, n_feature=F, ut_resident=ut_resident,
        compute_dtype=compute_dtype)

    return pl.pallas_call(
        kernel,
        out_shape=jax.ShapeDtypeStruct((L, S), jnp.float32),
        grid_spec=pltpu.PrefetchScalarGridSpec(
            num_scalar_prefetch=0,
            grid=grid,
            in_specs=[
                ut_spec,
                # x tiled along K (k) and the sample/lane axis (j); ragged
                # edges handled by cdiv grid + in-kernel K mask.
                pl.BlockSpec((tf, tn), lambda j, k: (k, j)),
            ],
            # Output block constant across k -> resident f32 accumulator.
            out_specs=pl.BlockSpec((L, tn), lambda j, k: (0, j)),
        ),
        compiler_params=pltpu.CompilerParams(
            dimension_semantics=("parallel", "arbitrary"),
            # 48 MiB: above v5e/v6e scoped defaults, safely below v7x's
            # 64 MiB physical VMEM; default tiles use ~25 MiB.
            vmem_limit_bytes=48 * 1024 * 1024,
        ),
    )(ut, x)


def init_spatial_pca_params(key, n_feature, n_latent):
    """Mirror SpatialPCA.__init__: uniform(0,1) init + Gram-Schmidt (reduced QR)."""
    u0 = jax.random.uniform(key, (n_feature, n_latent), dtype=jnp.float32)
    q, _ = jnp.linalg.qr(u0, mode="reduced")
    return q.astype(jnp.float32)


# TODO(synk): the SGD training loop (`reduce`), ReduceLROnPlateau scheduling,
# spatial loss, per-epoch QR re-orthonormalization, svd_lowrank init and
# AnnData loading are host/driver-side glue with no Pallas equivalent; only
# the forward projection is kernelized.


if __name__ == "__main__":
    key = jax.random.PRNGKey(0)
    k_u, k_x = jax.random.split(key)

    # Small but non-trivial shapes: genes x latent x spots; S and F are NOT
    # multiples of the tiles, exercising ragged tails and the K mask.
    n_feature = 300   # genes
    n_latent = 16     # PCs
    n_sample = 200    # spots / cells

    U = init_spatial_pca_params(k_u, n_feature, n_latent)            # (F, L)
    x = jax.random.normal(k_x, (n_feature, n_sample), jnp.float32)   # (F, S)

    ref = jnp.matmul(U.T, x, precision=jax.lax.Precision.HIGHEST)

    # 1) Default path: native f32 streaming, large tiles, resident Ut.
    out = jax.block_until_ready(sppca_forward(U, x))
    assert out.shape == (n_latent, n_sample)
    assert jnp.allclose(out, ref, atol=1e-3, rtol=1e-3), "default path mismatch"

    # 2) Small explicit tiles -> multi-step grid on both axes (2 sample tiles
    #    x 3 K tiles) with ragged tails on both axes.
    out_small = jax.block_until_ready(sppca_forward(U, x, tn=128, tf=128))
    assert jnp.allclose(out_small, ref, atol=1e-3, rtol=1e-3), "tiled path mismatch"

    # 3) Force the non-resident (tiled) Ut path.
    out_tiled_ut = jax.block_until_ready(
        sppca_forward(U, x, tn=256, tf=128, ut_resident_bytes=0))
    assert jnp.allclose(out_tiled_ut, ref, atol=1e-3, rtol=1e-3), "Ut-tiled mismatch"

    # 4) In-kernel bf16 cast path (looser tolerance).
    out_bf16 = jax.block_until_ready(
        sppca_forward(U, x, compute_dtype=jnp.bfloat16))
    assert jnp.allclose(out_bf16, ref, atol=5e-2, rtol=5e-2), "bf16 path mismatch"

    print("KERNEL_OK")
</pallas_src>

<mosaic_0001>
module attributes {stable_mosaic.version = 11 : i64} {
  func.func @_sppca_forward_kernel(%arg0: i32, %arg1: i32, %arg2: memref<16x384xf32, #tpu.memory_space<vmem>>, %arg3: memref<384x256xf32, #tpu.memory_space<vmem>>, %arg4: memref<16x256xf32, #tpu.memory_space<vmem>>) attributes {dimension_semantics = [#tpu.dimension_semantics<parallel>, #tpu.dimension_semantics<arbitrary>], iteration_bounds = array<i64: 1, 1>, scalar_prefetch = 0 : i64, scratch_operands = 0 : i64, tpu.core_type = #tpu.core_type<tc>, window_params = [{pipeline_mode = #tpu.pipeline_mode<synchronous>, transform_indices = @transform_0, window_bounds = array<i64: 16, 384>}, {transform_indices = @transform_1, window_bounds = array<i64: 384, 256>}, {transform_indices = @transform_2, window_bounds = array<i64: 16, 256>}]} {
    %c0_i32 = arith.constant 0 : i32
    %0 = arith.cmpi eq, %arg1, %c0_i32 : i32
    %1 = arith.extui %0 : i1 to i32
    %c0_i32_0 = arith.constant 0 : i32
    %2 = arith.cmpi ne, %1, %c0_i32_0 : i32
    scf.if %2 {
      %cst_9 = arith.constant 0.000000e+00 : f32
      %20 = vector.broadcast %cst_9 : f32 to vector<16x256xf32>
      %c0_10 = arith.constant 0 : index
      %c0_11 = arith.constant 0 : index
      %21 = vector.load %arg4[%c0_10, %c0_11] : memref<16x256xf32, #tpu.memory_space<vmem>>, vector<16x256xf32>
      tpu.vector_store %arg4[%c0_10, %c0_11], %20 {strides = array<i32>} : memref<16x256xf32, #tpu.memory_space<vmem>>, vector<16x256xf32>,
    } else {
    }
    %c384_i32 = arith.constant 384 : i32
    %3 = arith.muli %arg1, %c384_i32 : i32
    %4 = tpu.assume_multiple %3, 128 : i32
    %c0 = arith.constant 0 : index
    %5 = arith.index_cast %4 : i32 to index
    %6 = vector.load %arg2[%c0, %5] : memref<16x384xf32, #tpu.memory_space<vmem>>, vector<16x384xf32>
    %c0_1 = arith.constant 0 : index
    %c0_2 = arith.constant 0 : index
    %7 = vector.load %arg3[%c0_1, %c0_2] : memref<384x256xf32, #tpu.memory_space<vmem>>, vector<384x256xf32>
    %8 = tpu.iota {dimensions = array<i32: 0>} : vector<384x256xi32>
    %c384_i32_3 = arith.constant 384 : i32
    %9 = arith.muli %arg1, %c384_i32_3 : i32
    %c300_i32 = arith.constant 300 : i32
    %10 = arith.subi %c300_i32, %9 : i32
    %11 = vector.broadcast %10 : i32 to vector<384x256xi32>
    %12 = arith.cmpi slt, %8, %11 : vector<384x256xi32>
    %c0_i32_4 = arith.constant 0 : i32
    %13 = arith.sitofp %c0_i32_4 : i32 to f32
    %14 = vector.broadcast %13 : f32 to vector<384x256xf32>
    %15 = arith.select %12, %7, %14 : vector<384x256xi1>, vector<384x256xf32>
    %c0_5 = arith.constant 0 : index
    %c0_6 = arith.constant 0 : index
    %16 = vector.load %arg4[%c0_5, %c0_6] : memref<16x256xf32, #tpu.memory_space<vmem>>, vector<16x256xf32>
    %cst = arith.constant dense<0.000000e+00> : vector<16x256xf32>
    %17 = tpu.matmul %6, %15, %cst {dimension_numbers = #tpu.dot_dimension_numbers<[1], [0], [0], [1], [0, 0, 1, 1], [], []>} : vector<16x384xf32>, vector<384x256xf32>, vector<16x256xf32> -> vector<16x256xf32>
    %18 = arith.addf %16, %17 : vector<16x256xf32>
    %c0_7 = arith.constant 0 : index
    %c0_8 = arith.constant 0 : index
    %19 = vector.load %arg4[%c0_7, %c0_8] : memref<16x256xf32, #tpu.memory_space<vmem>>, vector<16x256xf32>
    tpu.vector_store %arg4[%c0_7, %c0_8], %18 {strides = array<i32>} : memref<16x256xf32, #tpu.memory_space<vmem>>, vector<16x256xf32>,
    return
  }
  func.func @transform_0(%arg0: i32, %arg1: i32) -> (i32, i32) {
    %c0_i32 = arith.constant 0 : i32
    %c0_i32_0 = arith.constant 0 : i32
    %c0_i32_1 = arith.constant 0 : i32
    return %c0_i32, %c0_i32_0 : i32, i32
  }
  func.func @transform_1(%arg0: i32, %arg1: i32) -> (i32, i32) {
    %c0_i32 = arith.constant 0 : i32
    return %arg1, %arg0 : i32, i32
  }
  func.func @transform_2(%arg0: i32, %arg1: i32) -> (i32, i32) {
    %c0_i32 = arith.constant 0 : i32
    %c0_i32_0 = arith.constant 0 : i32
    return %c0_i32, %arg0 : i32, i32
  }
}

</mosaic_0001>

<llo_original>
// kernel: sppca_forward.1
$region0: #{sppca_forward.1}
  #allocation0 [shape = 'u32[]', space=smem, size = 0x4, offset = 0x4, fixed_abs, tag = 'smem constant byte address 0x4 - core index']
  #allocation1 [shape = 'u32[144,128]{1,0:T(1,128)}', space=vmem, size = 0x12000, scoped, tag = 'internal scratch']
  %s0 = inlined_call_operand.vmem [shape: f32[16,384], index: 0, kind: input, shape index: {}]
  %s1 = inlined_call_operand.vmem [shape: f32[300,200], index: 1, kind: input, shape index: {}]
  %s2 = inlined_call_operand.hbm [shape: f32[16,200], index: 2, kind: output, shape index: {}]
  %s3 = sld [smem:[#allocation0]]
  $region22: #{sppca_forward.1} parent=0
    _
  %s5 = ssub.s32 1, %s3
  %s6 = scalar_select 0, %s5, %s3
  $region1: #{sppca_forward.1} parent=0
    #allocation2 [shape = 'u8[16384]{0}', space=vmem, size = 0x4000, scoped, tag = 'output window, operand 0, single buffered']
    #allocation3 [shape = 's32[1]{0}', space=sflag, size = 0x4, scoped, tag = 'scoped memory for sppca_forward.1']
    %7 = vsyncpa [#allocation3], 0
    // Predicated region
    $region2: #{sppca_forward.1} parent=1 // pred_check
      _
    $region3: #{sppca_forward.1} parent=1 // pred_check_branch
      %9 = sbr.rel (0) target = $region5
    $region4: #{sppca_forward.1} parent=1 // pred_region
      _
    $region5: #{sppca_forward.1} parent=1 // pred_fallthru
      _
    // Predicated region
    $region6: #{sppca_forward.1} parent=1 // pred_check
      _
    $region7: #{sppca_forward.1} parent=1 // pred_check_branch
      %11 = sbr.rel (0) target = $region9
    $region8: #{sppca_forward.1} parent=1 // pred_region
      _
    $region9: #{sppca_forward.1} parent=1 // pred_fallthru
      _
    %p12 = scmp.eq.s32.totalorder 0, 0
    // Predicated region
    $region10: #{sppca_forward.1} parent=1 // pred_check
      %p13 = pneg %p12
    $region11: #{sppca_forward.1} parent=1 // pred_check_branch
      %15 = sbr.rel (%p13) target = $region13
    $region12: #{sppca_forward.1} parent=1 // pred_region
      %16 = vst [vmem:[#allocation2] sm:$0xff] 0.0
      %17 = vst [vmem:[#allocation2 + $0x8] sm:$0xff] 0.0
      %18 = vst [vmem:[#allocation2 + $0x10] sm:$0xff] 0.0
      %19 = vst [vmem:[#allocation2 + $0x18] sm:$0xff] 0.0
    $region13: #{sppca_forward.1} parent=1 // pred_fallthru
      _
    %s20 = smul.u32 0, 384
    %s21 = sshra.s32 %s20, 7
    %s22 = sand.u32 %s20, 127
    %s23 = smul.addr %s21, 8
    %s24 = scalar_lea.vmem %s0, %s23
    %v25 = vld [vmem:[%s24] sm:$0xff]
    %v26 = vld [vmem:[%s24 + $0x8] sm:$0xff]
    %v27 = vld [vmem:[%s24 + $0x10] sm:$0xff]
    %v28 = vld [vmem:[%s24 + $0x18] sm:$0xff]
    %v29 = vld [vmem:[%s24 + $0x20] sm:$0xff]
    %v30 = vld [vmem:[%s24 + $0x28] sm:$0xff]
    %v31 = vld [vmem:[%s1] sm:$0xff]
    %v32 = vld [vmem:[%s1 + $0x8] sm:$0xff]
    %v33 = vld [vmem:[%s1 + $0x10] sm:$0xff]
    %v34 = vld [vmem:[%s1 + $0x18] sm:$0xff]
    %v35 = vld [vmem:[%s1 + $0x20] sm:$0xff]
    %v36 = vld [vmem:[%s1 + $0x28] sm:$0xff]
    %v37 = vld [vmem:[%s1 + $0x30] sm:$0xff]
    %v38 = vld [vmem:[%s1 + $0x38] sm:$0xff]
    %v39 = vld [vmem:[%s1 + $0x40] sm:$0xff]
    %v40 = vld [vmem:[%s1 + $0x48] sm:$0xff]
    %v41 = vld [vmem:[%s1 + $0x50] sm:$0xff]
    %v42 = vld [vmem:[%s1 + $0x58] sm:$0xff]
    %v43 = vld [vmem:[%s1 + $0x60] sm:$0xff]
    %v44 = vld [vmem:[%s1 + $0x68] sm:$0xff]
    %v45 = vld [vmem:[%s1 + $0x70] sm:$0xff]
    %v46 = vld [vmem:[%s1 + $0x78] sm:$0xff]
    %v47 = vld [vmem:[%s1 + $0x80] sm:$0xff]
    %v48 = vld [vmem:[%s1 + $0x88] sm:$0xff]
    %v49 = vld [vmem:[%s1 + $0x90] sm:$0xff]
    %v50 = vld [vmem:[%s1 + $0x98] sm:$0xff]
    %v51 = vld [vmem:[%s1 + $0xa0] sm:$0xff]
    %v52 = vld [vmem:[%s1 + $0xa8] sm:$0xff]
    %v53 = vld [vmem:[%s1 + $0xb0] sm:$0xff]
    %v54 = vld [vmem:[%s1 + $0xb8] sm:$0xff]
    %v55 = vld [vmem:[%s1 + $0xc0] sm:$0xff]
    %v56 = vld [vmem:[%s1 + $0xc8] sm:$0xff]
    %v57 = vld [vmem:[%s1 + $0xd0] sm:$0xff]
    %v58 = vld [vmem:[%s1 + $0xd8] sm:$0xff]
    %v59 = vld [vmem:[%s1 + $0xe0] sm:$0xff]
    %v60 = vld [vmem:[%s1 + $0xe8] sm:$0xff]
    %v61 = vld [vmem:[%s1 + $0xf0] sm:$0xff]
    %v62 = vld [vmem:[%s1 + $0xf8] sm:$0xff]
    %v63 = vld [vmem:[%s1 + $0x100] sm:$0xff]
    %v64 = vld [vmem:[%s1 + $0x108] sm:$0xff]
    %v65 = vld [vmem:[%s1 + $0x110] sm:$0xff]
    %v66 = vld [vmem:[%s1 + $0x118] sm:$0xff]
    %v67 = vld [vmem:[%s1 + $0x120] sm:$0xff]
    %v68 = vld [vmem:[%s1 + $0x128] sm:$0xff]
    %v69 = vld [vmem:[%s1 + $0x130] sm:$0xff]
    %v70 = vld [vmem:[%s1 + $0x138] sm:$0xff]
    %v71 = vld [vmem:[%s1 + $0x140] sm:$0xff]
    %v72 = vld [vmem:[%s1 + $0x148] sm:$0xff]
    %v73 = vld [vmem:[%s1 + $0x150] sm:$0xff]
    %v74 = vld [vmem:[%s1 + $0x158] sm:$0xff]
    %v75 = vld [vmem:[%s1 + $0x160] sm:$0xff]
    %v76 = vld [vmem:[%s1 + $0x168] sm:$0xff]
    %v77 = vld [vmem:[%s1 + $0x170] sm:$0xff]
    %v78 = vld [vmem:[%s1 + $0x178] sm:$0xff]
    %v79 = vld [vmem:[%s1 + $0x180] sm:$0xff]
    %v80 = vld [vmem:[%s1 + $0x188] sm:$0xff]
    %v81 = vld [vmem:[%s1 + $0x190] sm:$0xff]
    %v82 = vld [vmem:[%s1 + $0x198] sm:$0xff]
    %v83 = vld [vmem:[%s1 + $0x1a0] sm:$0xff]
    %v84 = vld [vmem:[%s1 + $0x1a8] sm:$0xff]
    %v85 = vld [vmem:[%s1 + $0x1b0] sm:$0xff]
    %v86 = vld [vmem:[%s1 + $0x1b8] sm:$0xff]
    %v87 = vld [vmem:[%s1 + $0x1c0] sm:$0xff]
    %v88 = vld [vmem:[%s1 + $0x1c8] sm:$0xff]
    %v89 = vld [vmem:[%s1 + $0x1d0] sm:$0xff]
    %v90 = vld [vmem:[%s1 + $0x1d8] sm:$0xff]
    %v91 = vld [vmem:[%s1 + $0x1e0] sm:$0xff]
    %v92 = vld [vmem:[%s1 + $0x1e8] sm:$0xff]
    %v93 = vld [vmem:[%s1 + $0x1f0] sm:$0xff]
    %v94 = vld [vmem:[%s1 + $0x1f8] sm:$0xff]
    %v95 = vld [vmem:[%s1 + $0x200] sm:$0xff]
    %v96 = vld [vmem:[%s1 + $0x208] sm:$0xff]
    %v97 = vld [vmem:[%s1 + $0x210] sm:$0xff]
    %v98 = vld [vmem:[%s1 + $0x218] sm:$0xff]
    %v99 = vld [vmem:[%s1 + $0x220] sm:$0xff]
    %v100 = vld [vmem:[%s1 + $0x228] sm:$0xff]
    %v101 = vld [vmem:[%s1 + $0x230] sm:$0xff]
    %v102 = vld [vmem:[%s1 + $0x238] sm:$0xff]
    %v103 = vld [vmem:[%s1 + $0x240] sm:$0xff]
    %v104 = vld [vmem:[%s1 + $0x248] sm:$0xff]
    %v105 = vld [vmem:[%s1 + $0x250] sm:$0xff]
    %v106 = vld [vmem:[%s1 + $0x258] sm:$0xff]
    %v107 = vld [vmem:[%s1 + $0x260] sm:$0xff]
    %v108 = vld [vmem:[%s1 + $0x268] sm:$0xff]
    %v109 = vld [vmem:[%s1 + $0x270] sm:$0xff]
    %v110 = vld [vmem:[%s1 + $0x278] sm:$0xff]
    %v111 = vld [vmem:[%s1 + $0x280] sm:$0xff]
    %v112 = vld [vmem:[%s1 + $0x288] sm:$0xff]
    %v113 = vld [vmem:[%s1 + $0x290] sm:$0xff]
    %v114 = vld [vmem:[%s1 + $0x298] sm:$0xff]
    %v115 = vld [vmem:[%s1 + $0x2a0] sm:$0xff]
    %v116 = vld [vmem:[%s1 + $0x2a8] sm:$0xff]
    %v117 = vld [vmem:[%s1 + $0x2b0] sm:$0xff]
    %v118 = vld [vmem:[%s1 + $0x2b8] sm:$0xff]
    %v119 = vld [vmem:[%s1 + $0x2c0] sm:$0xff]
    %v120 = vld [vmem:[%s1 + $0x2c8] sm:$0xff]
    %v121 = vld [vmem:[%s1 + $0x2d0] sm:$0xff]
    %v122 = vld [vmem:[%s1 + $0x2d8] sm:$0xff]
    %v123 = vld [vmem:[%s1 + $0x2e0] sm:$0xff]
    %v124 = vld [vmem:[%s1 + $0x2e8] sm:$0xff]
    %v125 = vld [vmem:[%s1 + $0x2f0] sm:$0xff]
    %v126 = vld [vmem:[%s1 + $0x2f8] sm:$0xff]
    %v127 = vlaneseq
    %v128 = vshrl.u32 %v127, 7
    %v129 = vadd.s32 %v128, 8
    %v130 = vadd.s32 %v128, 16
    %v131 = vadd.s32 %v128, 24
    %v132 = vadd.s32 %v128, 32
    %v133 = vadd.s32 %v128, 40
    %v134 = vadd.s32 %v128, 48
    %v135 = vadd.s32 %v128, 56
    %v136 = vadd.s32 %v128, 64
    %v137 = vadd.s32 %v128, 72
    %v138 = vadd.s32 %v128, 80
    %v139 = vadd.s32 %v128, 88
    %v140 = vadd.s32 %v128, 96
    %v141 = vadd.s32 %v128, 104
    %v142 = vadd.s32 %v128, 112
    %v143 = vadd.s32 %v128, 120
    %v144 = vadd.s32 %v128, 128
    %v145 = vadd.s32 %v128, 136
    %v146 = vadd.s32 %v128, 144
    %v147 = vadd.s32 %v128, 152
    %v148 = vadd.s32 %v128, 160
    %v149 = vadd.s32 %v128, 168
    %v150 = vadd.s32 %v128, 176
    %v151 = vadd.s32 %v128, 184
    %v152 = vadd.s32 %v128, 192
    %v153 = vadd.s32 %v128, 200
    %v154 = vadd.s32 %v128, 208
    %v155 = vadd.s32 %v128, 216
    %v156 = vadd.s32 %v128, 224
    %v157 = vadd.s32 %v128, 232
    %v158 = vadd.s32 %v128, 240
    %v159 = vadd.s32 %v128, 248
    %v160 = vadd.s32 %v128, 256
    %v161 = vadd.s32 %v128, 264
    %v162 = vadd.s32 %v128, 272
    %v163 = vadd.s32 %v128, 280
    %v164 = vadd.s32 %v128, 288
    %v165 = vadd.s32 %v128, 296
    %v166 = vadd.s32 %v128, 304
    %v167 = vadd.s32 %v128, 312
    %v168 = vadd.s32 %v128, 320
    %v169 = vadd.s32 %v128, 328
    %v170 = vadd.s32 %v128, 336
    %v171 = vadd.s32 %v128, 344
    %v172 = vadd.s32 %v128, 352
    %v173 = vadd.s32 %v128, 360
    %v174 = vadd.s32 %v128, 368
    %v175 = vadd.s32 %v128, 376
    %s176 = ssub.s32 300, %s20
    %v177 = vstv %s176
    %vm178 = vcmp.lt.s32.totalorder %v128, %v177
    %vm179 = vcmp.lt.s32.totalorder %v129, %v177
    %vm180 = vcmp.lt.s32.totalorder %v130, %v177
    %vm181 = vcmp.lt.s32.totalorder %v131, %v177
    %vm182 = vcmp.lt.s32.totalorder %v132, %v177
    %vm183 = vcmp.lt.s32.totalorder %v133, %v177
    %vm184 = vcmp.lt.s32.totalorder %v134, %v177
    %vm185 = vcmp.lt.s32.totalorder %v135, %v177
    %vm186 = vcmp.lt.s32.totalorder %v136, %v177
    %vm187 = vcmp.lt.s32.totalorder %v137, %v177
    %vm188 = vcmp.lt.s32.totalorder %v138, %v177
    %vm189 = vcmp.lt.s32.totalorder %v139, %v177
    %vm190 = vcmp.lt.s32.totalorder %v140, %v177
    %vm191 = vcmp.lt.s32.totalorder %v141, %v177
    %vm192 = vcmp.lt.s32.totalorder %v142, %v177
    %vm193 = vcmp.lt.s32.totalorder %v143, %v177
    %vm194 = vcmp.lt.s32.totalorder %v144, %v177
    %vm195 = vcmp.lt.s32.totalorder %v145, %v177
    %vm196 = vcmp.lt.s32.totalorder %v146, %v177
    %vm197 = vcmp.lt.s32.totalorder %v147, %v177
    %vm198 = vcmp.lt.s32.totalorder %v148, %v177
    %vm199 = vcmp.lt.s32.totalorder %v149, %v177
    %vm200 = vcmp.lt.s32.totalorder %v150, %v177
    %vm201 = vcmp.lt.s32.totalorder %v151, %v177
    %vm202 = vcmp.lt.s32.totalorder %v152, %v177
    %vm203 = vcmp.lt.s32.totalorder %v153, %v177
    %vm204 = vcmp.lt.s32.totalorder %v154, %v177
    %vm205 = vcmp.lt.s32.totalorder %v155, %v177
    %vm206 = vcmp.lt.s32.totalorder %v156, %v177
    %vm207 = vcmp.lt.s32.totalorder %v157, %v177
    %vm208 = vcmp.lt.s32.totalorder %v158, %v177
    %vm209 = vcmp.lt.s32.totalorder %v159, %v177
    %vm210 = vcmp.lt.s32.totalorder %v160, %v177
    %vm211 = vcmp.lt.s32.totalorder %v161, %v177
    %vm212 = vcmp.lt.s32.totalorder %v162, %v177
    %vm213 = vcmp.lt.s32.totalorder %v163, %v177
    %vm214 = vcmp.lt.s32.totalorder %v164, %v177
    %vm215 = vcmp.lt.s32.totalorder %v165, %v177
    %vm216 = vcmp.lt.s32.totalorder %v166, %v177
    %vm217 = vcmp.lt.s32.totalorder %v167, %v177
    %vm218 = vcmp.lt.s32.totalorder %v168, %v177
    %vm219 = vcmp.lt.s32.totalorder %v169, %v177
    %vm220 = vcmp.lt.s32.totalorder %v170, %v177
    %vm221 = vcmp.lt.s32.totalorder %v171, %v177
    %vm222 = vcmp.lt.s32.totalorder %v172, %v177
    %vm223 = vcmp.lt.s32.totalorder %v173, %v177
    %vm224 = vcmp.lt.s32.totalorder %v174, %v177
    %vm225 = vcmp.lt.s32.totalorder %v175, %v177
    %v226 = vsel %vm178, %v31, 0.0
    %v227 = vsel %vm178, %v32, 0.0
    %v228 = vsel %vm179, %v33, 0.0
    %v229 = vsel %vm179, %v34, 0.0
    %v230 = vsel %vm180, %v35, 0.0
    %v231 = vsel %vm180, %v36, 0.0
    %v232 = vsel %vm181, %v37, 0.0
    %v233 = vsel %vm181, %v38, 0.0
    %v234 = vsel %vm182, %v39, 0.0
    %v235 = vsel %vm182, %v40, 0.0
    %v236 = vsel %vm183, %v41, 0.0
    %v237 = vsel %vm183, %v42, 0.0
    %v238 = vsel %vm184, %v43, 0.0
    %v239 = vsel %vm184, %v44, 0.0
    %v240 = vsel %vm185, %v45, 0.0
    %v241 = vsel %vm185, %v46, 0.0
    %v242 = vsel %vm186, %v47, 0.0
    %v243 = vsel %vm186, %v48, 0.0
    %v244 = vsel %vm187, %v49, 0.0
    %v245 = vsel %vm187, %v50, 0.0
    %v246 = vsel %vm188, %v51, 0.0
    %v247 = vsel %vm188, %v52, 0.0
    %v248 = vsel %vm189, %v53, 0.0
    %v249 = vsel %vm189, %v54, 0.0
    %v250 = vsel %vm190, %v55, 0.0
    %v251 = vsel %vm190, %v56, 0.0
    %v252 = vsel %vm191, %v57, 0.0
    %v253 = vsel %vm191, %v58, 0.0
    %v254 = vsel %vm192, %v59, 0.0
    %v255 = vsel %vm192, %v60, 0.0
    %v256 = vsel %vm193, %v61, 0.0
    %v257 = vsel %vm193, %v62, 0.0
    %v258 = vsel %vm194, %v63, 0.0
    %v259 = vsel %vm194, %v64, 0.0
    %v260 = vsel %vm195, %v65, 0.0
    %v261 = vsel %vm195, %v66, 0.0
    %v262 = vsel %vm196, %v67, 0.0
    %v263 = vsel %vm196, %v68, 0.0
    %v264 = vsel %vm197, %v69, 0.0
    %v265 = vsel %vm197, %v70, 0.0
    %v266 = vsel %vm198, %v71, 0.0
    %v267 = vsel %vm198, %v72, 0.0
    %v268 = vsel %vm199, %v73, 0.0
    %v269 = vsel %vm199, %v74, 0.0
    %v270 = vsel %vm200, %v75, 0.0
    %v271 = vsel %vm200, %v76, 0.0
    %v272 = vsel %vm201, %v77, 0.0
    %v273 = vsel %vm201, %v78, 0.0
    %v274 = vsel %vm202, %v79, 0.0
    %v275 = vsel %vm202, %v80, 0.0
    %v276 = vsel %vm203, %v81, 0.0
    %v277 = vsel %vm203, %v82, 0.0
    %v278 = vsel %vm204, %v83, 0.0
    %v279 = vsel %vm204, %v84, 0.0
    %v280 = vsel %vm205, %v85, 0.0
    %v281 = vsel %vm205, %v86, 0.0
    %v282 = vsel %vm206, %v87, 0.0
    %v283 = vsel %vm206, %v88, 0.0
    %v284 = vsel %vm207, %v89, 0.0
    %v285 = vsel %vm207, %v90, 0.0
    %v286 = vsel %vm208, %v91, 0.0
    %v287 = vsel %vm208, %v92, 0.0
    %v288 = vsel %vm209, %v93, 0.0
    %v289 = vsel %vm209, %v94, 0.0
    %v290 = vsel %vm210, %v95, 0.0
    %v291 = vsel %vm210, %v96, 0.0
    %v292 = vsel %vm211, %v97, 0.0
    %v293 = vsel %vm211, %v98, 0.0
    %v294 = vsel %vm212, %v99, 0.0
    %v295 = vsel %vm212, %v100, 0.0
    %v296 = vsel %vm213, %v101, 0.0
    %v297 = vsel %vm213, %v102, 0.0
    %v298 = vsel %vm214, %v103, 0.0
    %v299 = vsel %vm214, %v104, 0.0
    %v300 = vsel %vm215, %v105, 0.0
    %v301 = vsel %vm215, %v106, 0.0
    %v302 = vsel %vm216, %v107, 0.0
    %v303 = vsel %vm216, %v108, 0.0
    %v304 = vsel %vm217, %v109, 0.0
    %v305 = vsel %vm217, %v110, 0.0
    %v306 = vsel %vm218, %v111, 0.0
    %v307 = vsel %vm218, %v112, 0.0
    %v308 = vsel %vm219, %v113, 0.0
    %v309 = vsel %vm219, %v114, 0.0
    %v310 = vsel %vm220, %v115, 0.0
    %v311 = vsel %vm220, %v116, 0.0
    %v312 = vsel %vm221, %v117, 0.0
    %v313 = vsel %vm221, %v118, 0.0
    %v314 = vsel %vm222, %v119, 0.0
    %v315 = vsel %vm222, %v120, 0.0
    %v316 = vsel %vm223, %v121, 0.0
    %v317 = vsel %vm223, %v122, 0.0
    %v318 = vsel %vm224, %v123, 0.0
    %v319 = vsel %vm224, %v124, 0.0
    %v320 = vsel %vm225, %v125, 0.0
    %v321 = vsel %vm225, %v126, 0.0
    %v322 = vld [vmem:[#allocation2] sm:$0xff]
    %v323 = vld [vmem:[#allocation2 + $0x8] sm:$0xff]
    %v324 = vld [vmem:[#allocation2 + $0x10] sm:$0xff]
    %v325 = vld [vmem:[#allocation2 + $0x18] sm:$0xff]
    %326 = vmatprep.subr.mxu0 %v227
    %327 = vmatpush1.msra.mxu0 %v226
    %328 = vmatprep.subr.mxu0 %v229
    %329 = vmatpush1.msra.mxu0 %v228
    %330 = vmatprep.subr.mxu0 %v231
    %331 = vmatpush1.msra.mxu0 %v230
    %332 = vmatprep.subr.mxu0 %v233
    %333 = vmatpush1.msra.mxu0 %v232
    %334 = vmatprep.subr.mxu0 %v235
    %335 = vmatpush1.msra.mxu0 %v234
    %336 = vmatprep.subr.mxu0 %v237
    %337 = vmatpush1.msra.mxu0 %v236
    %338 = vmatprep.subr.mxu0 %v239
    %339 = vmatpush1.msra.mxu0 %v238
    %340 = vmatprep.subr.mxu0 %v241
    %341 = vmatpush1.msra.mxu0 %v240
    %342 = vmatprep.subr.mxu0 %v243
    %343 = vmatpush1.msra.mxu0 %v242
    %344 = vmatprep.subr.mxu0 %v245
    %345 = vmatpush1.msra.mxu0 %v244
    %346 = vmatprep.subr.mxu0 %v247
    %347 = vmatpush1.msra.mxu0 %v246
    %348 = vmatprep.subr.mxu0 %v249
    %349 = vmatpush1.msra.mxu0 %v248
    %350 = vmatprep.subr.mxu0 %v251
    %351 = vmatpush1.msra.mxu0 %v250
    %352 = vmatprep.subr.mxu0 %v253
    %353 = vmatpush1.msra.mxu0 %v252
    %354 = vmatprep.subr.mxu0 %v255
    %355 = vmatpush1.msra.mxu0 %v254
    %356 = vmatprep.subr.mxu0 %v257
    %357 = vmatpush1.msra.mxu0 %v256
    %358 = vmatprep.subr.mxu0 %v259
    %359 = vmatpush1.msra.mxu0 %v258
    %360 = vmatprep.subr.mxu0 %v261
    %361 = vmatpush1.msra.mxu0 %v260
    %362 = vmatprep.subr.mxu0 %v263
    %363 = vmatpush1.msra.mxu0 %v262
    %364 = vmatprep.subr.mxu0 %v265
    %365 = vmatpush1.msra.mxu0 %v264
    %366 = vmatprep.subr.mxu0 %v267
    %367 = vmatpush1.msra.mxu0 %v266
    %368 = vmatprep.subr.mxu0 %v269
    %369 = vmatpush1.msra.mxu0 %v268
    %370 = vmatprep.subr.mxu0 %v271
    %371 = vmatpush1.msra.mxu0 %v270
    %372 = vmatprep.subr.mxu0 %v273
    %373 = vmatpush1.msra.mxu0 %v272
    %374 = vmatprep.subr.mxu0 %v275
    %375 = vmatpush1.msra.mxu0 %v274
    %376 = vmatprep.subr.mxu0 %v277
    %377 = vmatpush1.msra.mxu0 %v276
    %378 = vmatprep.subr.mxu0 %v279
    %379 = vmatpush1.msra.mxu0 %v278
    %380 = vmatprep.subr.mxu0 %v281
    %381 = vmatpush1.msra.mxu0 %v280
    %382 = vmatprep.subr.mxu0 %v283
    %383 = vmatpush1.msra.mxu0 %v282
    %384 = vmatprep.subr.mxu0 %v285
    %385 = vmatpush1.msra.mxu0 %v284
    %386 = vmatprep.subr.mxu0 %v287
    %387 = vmatpush1.msra.mxu0 %v286
    %388 = vmatprep.subr.mxu0 %v289
    %389 = vmatpush1.msra.mxu0 %v288
    %390 = vmatprep.mubr.f32.mxu0 %v26
    %391 = vmatmul.mubr.f32.gmra.mrb[0].mxu0 %v25
    %v392 = vpop.f32.mrb[0].mxu0
    %v393 = vadd.f32 0.0, %v392
    %v394 = vpop.f32.mrb[0].mxu0
    %v395 = vadd.f32 0.0, %v394
    %396 = vmatprep.mubr.f32.mxu0 %v29
    %397 = vmatmul.mubr.f32.gmra.mrb[0].mxu0 %v28
    %v398 = vpop.f32.mrb[0].mxu0
    %v399 = vadd.f32 0.0, %v398
    %v400 = vpop.f32.mrb[0].mxu0
    %v401 = vadd.f32 0.0, %v400
    %402 = vdwg.mxu0
    %403 = vmatprep.subr.mxu0 %v291
    %404 = vmatpush1.msra.mxu0 %v290
    %405 = vmatprep.subr.mxu0 %v293
    %406 = vmatpush1.msra.mxu0 %v292
    %407 = vmatprep.subr.mxu0 %v295
    %408 = vmatpush1.msra.mxu0 %v294
    %409 = vmatprep.subr.mxu0 %v297
    %410 = vmatpush1.msra.mxu0 %v296
    %411 = vmatprep.subr.mxu0 %v299
    %412 = vmatpush1.msra.mxu0 %v298
    %413 = vmatprep.subr.mxu0 %v301
    %414 = vmatpush1.msra.mxu0 %v300
    %415 = vmatprep.subr.mxu0 %v303
    %416 = vmatpush1.msra.mxu0 %v302
    %417 = vmatprep.subr.mxu0 %v305
    %418 = vmatpush1.msra.mxu0 %v304
    %419 = vmatprep.subr.mxu0 %v307
    %420 = vmatpush1.msra.mxu0 %v306
    %421 = vmatprep.subr.mxu0 %v309
    %422 = vmatpush1.msra.mxu0 %v308
    %423 = vmatprep.subr.mxu0 %v311
    %424 = vmatpush1.msra.mxu0 %v310
    %425 = vmatprep.subr.mxu0 %v313
    %426 = vmatpush1.msra.mxu0 %v312
    %427 = vmatprep.subr.mxu0 %v315
    %428 = vmatpush1.msra.mxu0 %v314
    %429 = vmatprep.subr.mxu0 %v317
    %430 = vmatpush1.msra.mxu0 %v316
    %431 = vmatprep.subr.mxu0 %v319
    %432 = vmatpush1.msra.mxu0 %v318
    %433 = vmatprep.subr.mxu0 %v321
    %434 = vmatpush1.msra.mxu0 %v320
    %435 = vmatprep.subr.mxu0 0.0
    %436 = vmatpush1.msra.mxu0 0.0
    %437 = vmatprep.subr.mxu0 0.0
    %438 = vmatpush1.msra.mxu0 0.0
    %439 = vmatprep.subr.mxu0 0.0
    %440 = vmatpush1.msra.mxu0 0.0
    %441 = vmatprep.subr.mxu0 0.0
    %442 = vmatpush1.msra.mxu0 0.0
    %443 = vmatprep.subr.mxu0 0.0
    %444 = vmatpush1.msra.mxu0 0.0
    %445 = vmatprep.subr.mxu0 0.0
    %446 = vmatpush1.msra.mxu0 0.0
    %447 = vmatprep.subr.mxu0 0.0
    %448 = vmatpush1.msra.mxu0 0.0
    %449 = vmatprep.subr.mxu0 0.0
    %450 = vmatpush1.msra.mxu0 0.0
    %451 = vmatprep.subr.mxu0 0.0
    %452 = vmatpush1.msra.mxu0 0.0
    %453 = vmatprep.subr.mxu0 0.0
    %454 = vmatpush1.msra.mxu0 0.0
    %455 = vmatprep.subr.mxu0 0.0
    %456 = vmatpush1.msra.mxu0 0.0
    %457 = vmatprep.subr.mxu0 0.0
    %458 = vmatpush1.msra.mxu0 0.0
    %459 = vmatprep.subr.mxu0 0.0
    %460 = vmatpush1.msra.mxu0 0.0
    %461 = vmatprep.subr.mxu0 0.0
    %462 = vmatpush1.msra.mxu0 0.0
    %463 = vmatprep.subr.mxu0 0.0
    %464 = vmatpush1.msra.mxu0 0.0
    %465 = vmatprep.subr.mxu0 0.0
    %466 = vmatpush1.msra.mxu0 0.0
    %467 = vmatprep.mubr.f32.mxu0 0.0
    %468 = vmatmul.mubr.f32.gmra.mrb[0].mxu0 %v27
    %v469 = vpop.f32.mrb[0].mxu0
    %v470 = vadd.f32 %v393, %v469
    %v471 = vpop.f32.mrb[0].mxu0
    %v472 = vadd.f32 %v395, %v471
    %473 = vmatprep.mubr.f32.mxu0 0.0
    %474 = vmatmul.mubr.f32.gmra.mrb[0].mxu0 %v30
    %v475 = vpop.f32.mrb[0].mxu0
    %v476 = vadd.f32 %v399, %v475
    %v477 = vpop.f32.mrb[0].mxu0
    %v478 = vadd.f32 %v401, %v477
    %479 = vdwg.mxu0
    %v480 = vadd.f32 %v322, %v470
    %v481 = vadd.f32 %v323, %v472
    %v482 = vadd.f32 %v324, %v476
    %v483 = vadd.f32 %v325, %v478
    %484 = vst [vmem:[#allocation2] sm:$0xff] %v480
    %485 = vst [vmem:[#allocation2 + $0x8] sm:$0xff] %v481
    %486 = vst [vmem:[#allocation2 + $0x10] sm:$0xff] %v482
    %487 = vst [vmem:[#allocation2 + $0x18] sm:$0xff] %v483
    // Predicated region
    $region14: #{sppca_forward.1} parent=1 // pred_check
      _
    $region15: #{sppca_forward.1} parent=1 // pred_check_branch
      %489 = sbr.rel (0) target = $region17
    $region16: #{sppca_forward.1} parent=1 // pred_region
      %s491 = ssub.s32 512, 512
      %492 = vsyncadd [#allocation3], %s491
      %s493 = sshll.u32 [#allocation2], 4
      %s494 = int_to_ptr.vmem [resolvable:$true] %s493
      %499 = dma.vmem_to_hbm [thread:$0]  %s494, 512, %s2, [#allocation3], 256, 256, 16
    $region17: #{sppca_forward.1} parent=1 // pred_fallthru
      _
    // Predicated region
    $region18: #{sppca_forward.1} parent=1 // pred_check
      _
    $region19: #{sppca_forward.1} parent=1 // pred_check_branch
      %501 = sbr.rel (0) target = $region21
    $region20: #{sppca_forward.1} parent=1 // pred_region
      %502 = dma.done [#allocation3], 512
    $region21: #{sppca_forward.1} parent=1 // pred_fallthru
      _
    %503 = vsyncpa [#allocation3], 1

</llo_original>
